<compile_context>
chip_gen: v6e
topology: v6e:2x2x1
jax: 0.10.0
libtpu: 0.0.40
codegen_flags: <defaults>
</compile_context>

<pallas_src>
import functools

import jax
import jax.numpy as jnp
from jax.experimental import pallas as pl
from jax.experimental.pallas import tpu as pltpu


def _round_up(x: int, m: int) -> int:
    return (x + m - 1) // m * m


def _two_layer_nn_kernel(x_ref, w1_ref, b1_ref, w2_ref, b2_ref, o_ref, h_ref):
    # h = relu(x @ W1^T + b1) ; y = h @ W2^T + b2   (weights pre-transposed/padded)
    # Matmuls in bf16 on the MXU with f32 accumulation; elementwise math in f32.
    x_bf16 = x_ref[...].astype(jnp.bfloat16)                       # [TN, d_in_p]
    h = jnp.dot(x_bf16, w1_ref[...], preferred_element_type=jnp.float32)
    h = jnp.maximum(h + b1_ref[...], 0.0)                          # f32 bias + ReLU
    h_ref[...] = h.astype(jnp.bfloat16)                            # stage via VMEM scratch
    y = jnp.dot(h_ref[...], w2_ref[...], preferred_element_type=jnp.float32)
    o_ref[...] = (y + b2_ref[...]).astype(o_ref.dtype)


def prepare_params(w1, b1, w2, b2):
    """One-time prep: transpose, zero-pad feature dims to 128, cast weights to bf16.

    Args (PyTorch nn.Linear layout):
      w1: [d_1, d_in], b1: [d_1], w2: [d_out, d_1], b2: [d_out]
    """
    d_1, d_in = w1.shape
    d_out = w2.shape[0]
    d_in_p = _round_up(d_in, 128)
    d_1_p = _round_up(d_1, 128)
    d_out_p = _round_up(d_out, 128)

    w1_t = jnp.zeros((d_in_p, d_1_p), jnp.bfloat16)
    w1_t = w1_t.at[:d_in, :d_1].set(w1.T.astype(jnp.bfloat16))
    w2_t = jnp.zeros((d_1_p, d_out_p), jnp.bfloat16)
    w2_t = w2_t.at[:d_1, :d_out].set(w2.T.astype(jnp.bfloat16))
    b1_p = jnp.zeros((1, d_1_p), jnp.float32).at[0, :d_1].set(b1.astype(jnp.float32))
    b2_p = jnp.zeros((1, d_out_p), jnp.float32).at[0, :d_out].set(b2.astype(jnp.float32))
    return dict(w1_t=w1_t, b1=b1_p, w2_t=w2_t, b2=b2_p, d_in=d_in, d_out=d_out)


def two_layer_nn_forward(x, params, *, tile_n: int = 256):
    """Forward pass of TwoLayerNN.  x: [N, d_in] f32 -> [N, d_out] f32."""
    w1_t, b1_p, w2_t, b2_p = params["w1_t"], params["b1"], params["w2_t"], params["b2"]
    d_in, d_out = params["d_in"], params["d_out"]
    d_in_p, d_1_p = w1_t.shape
    d_out_p = w2_t.shape[1]

    n = x.shape[0]
    tile_n = min(tile_n, _round_up(n, 8))          # keep (8,*) sublane alignment
    n_p = _round_up(n, tile_n)

    # Pad batch + input features with zeros (zero rows/cols do not change results).
    x_p = jnp.zeros((n_p, d_in_p), jnp.float32).at[:n, :d_in].set(x.astype(jnp.float32))

    grid = (n_p // tile_n,)
    out = pl.pallas_call(
        _two_layer_nn_kernel,
        out_shape=jax.ShapeDtypeStruct((n_p, d_out_p), jnp.float32),
        grid_spec=pltpu.PrefetchScalarGridSpec(
            num_scalar_prefetch=0,
            grid=grid,
            in_specs=[
                pl.BlockSpec((tile_n, d_in_p), lambda i: (i, 0)),    # x: tiled over N
                pl.BlockSpec((d_in_p, d_1_p), lambda i: (0, 0)),     # W1^T: resident
                pl.BlockSpec((1, d_1_p), lambda i: (0, 0)),          # b1: resident
                pl.BlockSpec((d_1_p, d_out_p), lambda i: (0, 0)),    # W2^T: resident
                pl.BlockSpec((1, d_out_p), lambda i: (0, 0)),        # b2: resident
            ],
            out_specs=pl.BlockSpec((tile_n, d_out_p), lambda i: (i, 0)),
            scratch_shapes=[pltpu.VMEM((tile_n, d_1_p), jnp.bfloat16)],
        ),
        compiler_params=pltpu.CompilerParams(
            dimension_semantics=("parallel",),          # megacore sharding on v7x
            vmem_limit_bytes=32 * 1024 * 1024,          # fits v5e/v6e/v7x scoped VMEM
        ),
    )(x_p, w1_t, b1_p, w2_t, b2_p)

    return out[:n, :d_out]


def init_params(key, d_in, d_1, d_out):
    """Deterministic init mimicking nn.Linear default U[-1/sqrt(fan_in), 1/sqrt(fan_in)]."""
    k1, k2, k3, k4 = jax.random.split(key, 4)
    bound1 = 1.0 / jnp.sqrt(d_in)
    bound2 = 1.0 / jnp.sqrt(d_1)
    w1 = jax.random.uniform(k1, (d_1, d_in), jnp.float32, -bound1, bound1)
    b1 = jax.random.uniform(k2, (d_1,), jnp.float32, -bound1, bound1)
    w2 = jax.random.uniform(k3, (d_out, d_1), jnp.float32, -bound2, bound2)
    b2 = jax.random.uniform(k4, (d_out,), jnp.float32, -bound2, bound2)
    return w1, b1, w2, b2


# TODO(synk): get_parameters/load_parameters (flat theta packing) are host-side
# utilities with no kernel equivalent; only the forward pass is implemented here.

if __name__ == "__main__":
    # Small shapes consistent with the module: d_in=4, d_1=32, d_out=2, batch=8.
    # NOTE: at these toy shapes the kernel is launch-overhead-bound; the tiling /
    # padding / residency structure above pays off at realistic N and d sizes.
    d_in, d_1, d_out = 4, 32, 2
    batch = 8

    key = jax.random.PRNGKey(0)
    kx, kp = jax.random.split(key)
    x = jax.random.normal(kx, (batch, d_in), jnp.float32)
    w1, b1, w2, b2 = init_params(kp, d_in, d_1, d_out)

    params = prepare_params(w1, b1, w2, b2)   # transpose/pad/cast once, not per call
    y = two_layer_nn_forward(x, params)
    jax.block_until_ready(y)

    # Pure-JAX f32 reference of the same forward semantics (kernel uses bf16 on the
    # MXU with f32 accumulation, so compare with a tolerance that covers bf16 rounding).
    h_ref = jnp.maximum(x @ w1.T + b1, 0.0)
    y_ref = h_ref @ w2.T + b2
    assert y.shape == (batch, d_out)
    assert jnp.allclose(y, y_ref, atol=2e-2, rtol=2e-2), (y, y_ref)

    print("KERNEL_OK")
</pallas_src>

<mosaic_0001>
module attributes {stable_mosaic.version = 11 : i64} {
  func.func @_two_layer_nn_kernel(%arg0: i32, %arg1: memref<8x128xf32, #tpu.memory_space<vmem>>, %arg2: memref<128x128xbf16, #tpu.memory_space<vmem>>, %arg3: memref<1x128xf32, #tpu.memory_space<vmem>>, %arg4: memref<128x128xbf16, #tpu.memory_space<vmem>>, %arg5: memref<1x128xf32, #tpu.memory_space<vmem>>, %arg6: memref<8x128xf32, #tpu.memory_space<vmem>>, %arg7: memref<8x128xbf16, #tpu.memory_space<vmem>>) attributes {dimension_semantics = [#tpu.dimension_semantics<parallel>], iteration_bounds = array<i64: 1>, scalar_prefetch = 0 : i64, scratch_operands = 1 : i64, tpu.core_type = #tpu.core_type<tc>, window_params = [{transform_indices = @transform_0, window_bounds = array<i64: 8, 128>}, {pipeline_mode = #tpu.pipeline_mode<synchronous>, transform_indices = @transform_1, window_bounds = array<i64: 128, 128>}, {pipeline_mode = #tpu.pipeline_mode<synchronous>, transform_indices = @transform_2, window_bounds = array<i64: 1, 128>}, {pipeline_mode = #tpu.pipeline_mode<synchronous>, transform_indices = @transform_3, window_bounds = array<i64: 128, 128>}, {pipeline_mode = #tpu.pipeline_mode<synchronous>, transform_indices = @transform_4, window_bounds = array<i64: 1, 128>}, {transform_indices = @transform_5, window_bounds = array<i64: 8, 128>}]} {
    %c0 = arith.constant 0 : index
    %c0_0 = arith.constant 0 : index
    %0 = vector.load %arg1[%c0, %c0_0] : memref<8x128xf32, #tpu.memory_space<vmem>>, vector<8x128xf32>
    %1 = arith.truncf %0 : vector<8x128xf32> to vector<8x128xbf16>
    %c0_1 = arith.constant 0 : index
    %c0_2 = arith.constant 0 : index
    %2 = vector.load %arg2[%c0_1, %c0_2] : memref<128x128xbf16, #tpu.memory_space<vmem>>, vector<128x128xbf16>
    %cst = arith.constant dense<0.000000e+00> : vector<8x128xf32>
    %3 = tpu.matmul %1, %2, %cst {dimension_numbers = #tpu.dot_dimension_numbers<[1], [0], [0], [1], [0, 0, 1, 1], [], []>} : vector<8x128xbf16>, vector<128x128xbf16>, vector<8x128xf32> -> vector<8x128xf32>
    %c0_3 = arith.constant 0 : index
    %c0_4 = arith.constant 0 : index
    %4 = vector.load %arg3[%c0_3, %c0_4] : memref<1x128xf32, #tpu.memory_space<vmem>>, vector<1x128xf32>
    %5 = vector.broadcast %4 : vector<1x128xf32> to vector<8x128xf32>
    %6 = arith.addf %3, %5 : vector<8x128xf32>
    %cst_5 = arith.constant 0.000000e+00 : f32
    %7 = vector.broadcast %cst_5 : f32 to vector<8x128xf32>
    %8 = arith.maximumf %6, %7 : vector<8x128xf32>
    %9 = arith.truncf %8 : vector<8x128xf32> to vector<8x128xbf16>
    %c0_6 = arith.constant 0 : index
    %c0_7 = arith.constant 0 : index
    %10 = vector.load %arg7[%c0_6, %c0_7] : memref<8x128xbf16, #tpu.memory_space<vmem>>, vector<8x128xbf16>
    tpu.vector_store %arg7[%c0_6, %c0_7], %9 {strides = array<i32>} : memref<8x128xbf16, #tpu.memory_space<vmem>>, vector<8x128xbf16>,
    %c0_8 = arith.constant 0 : index
    %c0_9 = arith.constant 0 : index
    %11 = vector.load %arg7[%c0_8, %c0_9] : memref<8x128xbf16, #tpu.memory_space<vmem>>, vector<8x128xbf16>
    %c0_10 = arith.constant 0 : index
    %c0_11 = arith.constant 0 : index
    %12 = vector.load %arg4[%c0_10, %c0_11] : memref<128x128xbf16, #tpu.memory_space<vmem>>, vector<128x128xbf16>
    %cst_12 = arith.constant dense<0.000000e+00> : vector<8x128xf32>
    %13 = tpu.matmul %11, %12, %cst_12 {dimension_numbers = #tpu.dot_dimension_numbers<[1], [0], [0], [1], [0, 0, 1, 1], [], []>} : vector<8x128xbf16>, vector<128x128xbf16>, vector<8x128xf32> -> vector<8x128xf32>
    %c0_13 = arith.constant 0 : index
    %c0_14 = arith.constant 0 : index
    %14 = vector.load %arg5[%c0_13, %c0_14] : memref<1x128xf32, #tpu.memory_space<vmem>>, vector<1x128xf32>
    %15 = vector.broadcast %14 : vector<1x128xf32> to vector<8x128xf32>
    %16 = arith.addf %13, %15 : vector<8x128xf32>
    %c0_15 = arith.constant 0 : index
    %c0_16 = arith.constant 0 : index
    %17 = vector.load %arg6[%c0_15, %c0_16] : memref<8x128xf32, #tpu.memory_space<vmem>>, vector<8x128xf32>
    tpu.vector_store %arg6[%c0_15, %c0_16], %16 {strides = array<i32>} : memref<8x128xf32, #tpu.memory_space<vmem>>, vector<8x128xf32>,
    return
  }
  func.func @transform_0(%arg0: i32) -> (i32, i32) {
    %c0_i32 = arith.constant 0 : i32
    %c0_i32_0 = arith.constant 0 : i32
    return %arg0, %c0_i32 : i32, i32
  }
  func.func @transform_1(%arg0: i32) -> (i32, i32) {
    %c0_i32 = arith.constant 0 : i32
    %c0_i32_0 = arith.constant 0 : i32
    %c0_i32_1 = arith.constant 0 : i32
    return %c0_i32, %c0_i32_0 : i32, i32
  }
  func.func @transform_2(%arg0: i32) -> (i32, i32) {
    %c0_i32 = arith.constant 0 : i32
    %c0_i32_0 = arith.constant 0 : i32
    %c0_i32_1 = arith.constant 0 : i32
    return %c0_i32, %c0_i32_0 : i32, i32
  }
  func.func @transform_3(%arg0: i32) -> (i32, i32) {
    %c0_i32 = arith.constant 0 : i32
    %c0_i32_0 = arith.constant 0 : i32
    %c0_i32_1 = arith.constant 0 : i32
    return %c0_i32, %c0_i32_0 : i32, i32
  }
  func.func @transform_4(%arg0: i32) -> (i32, i32) {
    %c0_i32 = arith.constant 0 : i32
    %c0_i32_0 = arith.constant 0 : i32
    %c0_i32_1 = arith.constant 0 : i32
    return %c0_i32, %c0_i32_0 : i32, i32
  }
  func.func @transform_5(%arg0: i32) -> (i32, i32) {
    %c0_i32 = arith.constant 0 : i32
    %c0_i32_0 = arith.constant 0 : i32
    return %arg0, %c0_i32 : i32, i32
  }
}

</mosaic_0001>

<llo_original>
// kernel: tpu_custom_call.1
$region0: #{tpu_custom_call.1}
  #allocation0 [shape = 'u32[]', space=smem, size = 0x4, offset = 0x4, fixed_abs, tag = 'smem constant byte address 0x4 - core index']
  #allocation1 [shape = 'u32[144,128]{1,0:T(1,128)}', space=vmem, size = 0x12000, scoped, tag = 'internal scratch']
  #allocation2 [shape = 'bf16[8,128]{1,0:T(8,128)(2,1)}', space=vmem, size = 0x800, scoped, tag = 'scratch operand']
  %s0 = inlined_call_operand.hbm [shape: f32[8,128], index: 0, kind: input, shape index: {}]
  %s1 = inlined_call_operand.hbm [shape: bf16[128,128], index: 1, kind: input, shape index: {}]
  %s2 = inlined_call_operand.vmem [shape: f32[1,128], index: 2, kind: input, shape index: {}]
  %s3 = inlined_call_operand.hbm [shape: bf16[128,128], index: 3, kind: input, shape index: {}]
  %s4 = inlined_call_operand.vmem [shape: f32[1,128], index: 4, kind: input, shape index: {}]
  %s5 = inlined_call_operand.hbm [shape: f32[8,128], index: 5, kind: output, shape index: {}]
  %s6 = sld [smem:[#allocation0]]
  $region42: #{tpu_custom_call.1} parent=0
    _
  %s8 = ssub.s32 1, %s6
  %s9 = scalar_select 0, %s8, %s6
  $region1: #{tpu_custom_call.1} parent=0
    #allocation3 [shape = 'u8[4096]{0}', space=vmem, size = 0x1000, scoped, tag = 'input window, operand 0, single buffered']
    #allocation4 [shape = 's32[1]{0}', space=sflag, size = 0x4, scoped, tag = 'scoped memory for tpu_custom_call.1']
    #allocation5 [shape = 's32[1]{0}', space=sflag, size = 0x4, scoped, tag = 'scoped memory for tpu_custom_call.1']
    #allocation6 [shape = 'u8[32768]{0}', space=vmem, size = 0x8000, scoped, tag = 'input window, operand 1, single buffered']
    #allocation7 [shape = 's32[1]{0}', space=sflag, size = 0x4, scoped, tag = 'scoped memory for tpu_custom_call.1']
    #allocation8 [shape = 'u8[32768]{0}', space=vmem, size = 0x8000, scoped, tag = 'input window, operand 3, single buffered']
    #allocation9 [shape = 'u8[4096]{0}', space=vmem, size = 0x1000, scoped, tag = 'output window, operand 0, single buffered']
    %10 = vsyncpa [#allocation4], 0
    %11 = vsyncpa [#allocation7], 0
    %12 = vsyncpa [#allocation5], 0
    // Predicated region
    $region2: #{tpu_custom_call.1} parent=1 // pred_check
      _
    $region3: #{tpu_custom_call.1} parent=1 // pred_check_branch
      %14 = sbr.rel (0) target = $region5
    $region4: #{tpu_custom_call.1} parent=1 // pred_region
      %s16 = ssub.s32 128, 128
      %17 = vsyncadd [#allocation4], %s16
      %s19 = sshll.u32 [#allocation3], 4
      %s20 = int_to_ptr.vmem [resolvable:$true] %s19
      %22 = dma.hbm_to_vmem [thread:$0]  %s0, 128, %s20, [#allocation4]
    $region5: #{tpu_custom_call.1} parent=1 // pred_fallthru
      _
    // Predicated region
    $region6: #{tpu_custom_call.1} parent=1 // pred_check
      _
    $region7: #{tpu_custom_call.1} parent=1 // pred_check_branch
      %24 = sbr.rel (0) target = $region9
    $region8: #{tpu_custom_call.1} parent=1 // pred_region
      %s26 = ssub.s32 1024, 1024
      %27 = vsyncadd [#allocation7], %s26
      %s28 = sshll.u32 [#allocation6], 4
      %s29 = int_to_ptr.vmem [resolvable:$true] %s28
      %34 = dma.hbm_to_vmem [thread:$0]  %s1, 1024, %s29, [#allocation7], 64, 64, 4
    $region9: #{tpu_custom_call.1} parent=1 // pred_fallthru
      _
    // Predicated region
    $region10: #{tpu_custom_call.1} parent=1 // pred_check
      _
    $region11: #{tpu_custom_call.1} parent=1 // pred_check_branch
      %36 = sbr.rel (0) target = $region13
    $region12: #{tpu_custom_call.1} parent=1 // pred_region
      _
    $region13: #{tpu_custom_call.1} parent=1 // pred_fallthru
      _
    // Predicated region
    $region14: #{tpu_custom_call.1} parent=1 // pred_check
      _
    $region15: #{tpu_custom_call.1} parent=1 // pred_check_branch
      %38 = sbr.rel (0) target = $region17
    $region16: #{tpu_custom_call.1} parent=1 // pred_region
      %s40 = ssub.s32 1024, 1024
      %41 = vsyncadd [#allocation7], %s40
      %s42 = sshll.u32 [#allocation8], 4
      %s43 = int_to_ptr.vmem [resolvable:$true] %s42
      %48 = dma.hbm_to_vmem [thread:$0]  %s3, 1024, %s43, [#allocation7], 64, 64, 4
    $region17: #{tpu_custom_call.1} parent=1 // pred_fallthru
      _
    // Predicated region
    $region18: #{tpu_custom_call.1} parent=1 // pred_check
      _
    $region19: #{tpu_custom_call.1} parent=1 // pred_check_branch
      %50 = sbr.rel (0) target = $region21
    $region20: #{tpu_custom_call.1} parent=1 // pred_region
      _
    $region21: #{tpu_custom_call.1} parent=1 // pred_fallthru
      _
    // Predicated region
    $region22: #{tpu_custom_call.1} parent=1 // pred_check
      _
    $region23: #{tpu_custom_call.1} parent=1 // pred_check_branch
      %52 = sbr.rel (0) target = $region25
    $region24: #{tpu_custom_call.1} parent=1 // pred_region
      %53 = dma.done [#allocation4], 128
    $region25: #{tpu_custom_call.1} parent=1 // pred_fallthru
      _
    // Predicated region
    $region26: #{tpu_custom_call.1} parent=1 // pred_check
      _
    $region27: #{tpu_custom_call.1} parent=1 // pred_check_branch
      %55 = sbr.rel (0) target = $region29
    $region28: #{tpu_custom_call.1} parent=1 // pred_region
      %56 = dma.done [#allocation7], 1024
    $region29: #{tpu_custom_call.1} parent=1 // pred_fallthru
      _
    // Predicated region
    $region30: #{tpu_custom_call.1} parent=1 // pred_check
      _
    $region31: #{tpu_custom_call.1} parent=1 // pred_check_branch
      %58 = sbr.rel (0) target = $region33
    $region32: #{tpu_custom_call.1} parent=1 // pred_region
      %59 = dma.done [#allocation7], 1024
    $region33: #{tpu_custom_call.1} parent=1 // pred_fallthru
      _
    %v61 = vld [vmem:[#allocation3] sm:$0xff]
    %v62 = vpack.c.bf16 %v61, %v61
    %v63 = vld [vmem:[#allocation6] sm:$0xf]
    %v64 = vld [vmem:[#allocation6 + $0x4] sm:$0xf]
    %v65 = vld [vmem:[#allocation6 + $0x8] sm:$0xf]
    %v66 = vld [vmem:[#allocation6 + $0xc] sm:$0xf]
    %v67 = vld [vmem:[#allocation6 + $0x10] sm:$0xf]
    %v68 = vld [vmem:[#allocation6 + $0x14] sm:$0xf]
    %v69 = vld [vmem:[#allocation6 + $0x18] sm:$0xf]
    %v70 = vld [vmem:[#allocation6 + $0x1c] sm:$0xf]
    %v71 = vld [vmem:[#allocation6 + $0x20] sm:$0xf]
    %v72 = vld [vmem:[#allocation6 + $0x24] sm:$0xf]
    %v73 = vld [vmem:[#allocation6 + $0x28] sm:$0xf]
    %v74 = vld [vmem:[#allocation6 + $0x2c] sm:$0xf]
    %v75 = vld [vmem:[#allocation6 + $0x30] sm:$0xf]
    %v76 = vld [vmem:[#allocation6 + $0x34] sm:$0xf]
    %v77 = vld [vmem:[#allocation6 + $0x38] sm:$0xf]
    %v78 = vld [vmem:[#allocation6 + $0x3c] sm:$0xf]
    %v79 = vld [vmem:[%s2] sm:$0x1]
    %v81 = vlaneseq
    %v82 = vshrl.u32 %v81, 7
    %v83 = vsub.s32 0, %v82
    %v84 = vrot.slane %v79, %v83
    %v102 = vunpack.c.l.b16 %v63
    %v103 = vunpack.c.l.b16 %v64
    %v104 = vunpack.c.l.b16 %v65
    %v105 = vunpack.c.l.b16 %v66
    %v106 = vunpack.c.l.b16 %v67
    %v107 = vunpack.c.l.b16 %v68
    %v108 = vunpack.c.l.b16 %v69
    %v109 = vunpack.c.l.b16 %v70
    %v110 = vunpack.c.l.b16 %v71
    %v111 = vunpack.c.l.b16 %v72
    %v112 = vunpack.c.l.b16 %v73
    %v113 = vunpack.c.l.b16 %v74
    %v114 = vunpack.c.l.b16 %v75
    %v115 = vunpack.c.l.b16 %v76
    %v116 = vunpack.c.l.b16 %v77
    %v117 = vunpack.c.l.b16 %v78
    %v118 = vpack.c.b16 %v103, %v102
    %v119 = vpack.c.b16 %v105, %v104
    %v120 = vpack.c.b16 %v107, %v106
    %v121 = vpack.c.b16 %v109, %v108
    %v122 = vpack.c.b16 %v111, %v110
    %v123 = vpack.c.b16 %v113, %v112
    %v124 = vpack.c.b16 %v115, %v114
    %v125 = vpack.c.b16 %v117, %v116
    %134 = vmatprep.subr.bf16.mxu0 0
    %135 = vmatpush1.bf16.msra.mxu0 %v125
    %136 = vmatprep.subr.bf16.mxu0 0
    %137 = vmatpush1.bf16.msra.mxu0 %v124
    %138 = vmatprep.subr.bf16.mxu0 0
    %139 = vmatpush1.bf16.msra.mxu0 %v123
    %140 = vmatprep.subr.bf16.mxu0 0
    %141 = vmatpush1.bf16.msra.mxu0 %v122
    %142 = vmatprep.subr.bf16.mxu0 0
    %143 = vmatpush1.bf16.msra.mxu0 %v121
    %144 = vmatprep.subr.bf16.mxu0 0
    %145 = vmatpush1.bf16.msra.mxu0 %v120
    %146 = vmatprep.subr.bf16.mxu0 0
    %147 = vmatpush1.bf16.msra.mxu0 %v119
    %148 = vmatprep.subr.bf16.mxu0 0
    %149 = vmatpush1.bf16.msra.mxu0 %v118
    %150 = vmatprep.subr.bf16.mxu0 0
    %151 = vmatpush2.bf16.msra.mxu0 0
    %152 = vmatprep.subr.bf16.mxu0 0
    %153 = vmatpush2.bf16.msra.mxu0 0
    %154 = vmatprep.subr.bf16.mxu0 0
    %155 = vmatpush2.bf16.msra.mxu0 0
    %156 = vmatprep.subr.bf16.mxu0 0
    %157 = vmatpush2.bf16.msra.mxu0 0
    %158 = vmatprep.subr.bf16.mxu0 0
    %159 = vmatpush2.bf16.msra.mxu0 0
    %160 = vmatprep.subr.bf16.mxu0 0
    %161 = vmatpush2.bf16.msra.mxu0 0
    %162 = vmatprep.subr.bf16.mxu0 0
    %163 = vmatpush2.bf16.msra.mxu0 0
    %164 = vmatprep.subr.bf16.mxu0 0
    %165 = vmatpush2.bf16.msra.mxu0 0
    %166 = vmatprep.mubr.bf16.mxu0 0
    %167 = vmatmul.mubr.bf16.gmra.mxu0 %v62
    %v168 = vpop.f32.mrf.mxu0
    %v169 = vadd.f32 %v84, %v168
    %v170 = vpop.f32.mrf.mxu0
    %v171 = vpop.f32.mrf.mxu0
    %v172 = vpop.f32.mrf.mxu0
    %173 = vdwg.mxu0
    %v174 = vmax.f32 %v169, 0.0
    %v175 = vpack.c.bf16 %v174, %v174
    %176 = vst [vmem:[#allocation2] sm:$0xf] %v175
    %v177 = vld [vmem:[#allocation2] sm:$0xf]
    %v178 = vld [vmem:[#allocation8] sm:$0xf]
    %v179 = vld [vmem:[#allocation8 + $0x4] sm:$0xf]
    %v180 = vld [vmem:[#allocation8 + $0x8] sm:$0xf]
    %v181 = vld [vmem:[#allocation8 + $0xc] sm:$0xf]
    %v182 = vld [vmem:[#allocation8 + $0x10] sm:$0xf]
    %v183 = vld [vmem:[#allocation8 + $0x14] sm:$0xf]
    %v184 = vld [vmem:[#allocation8 + $0x18] sm:$0xf]
    %v185 = vld [vmem:[#allocation8 + $0x1c] sm:$0xf]
    %v186 = vld [vmem:[#allocation8 + $0x20] sm:$0xf]
    %v187 = vld [vmem:[#allocation8 + $0x24] sm:$0xf]
    %v188 = vld [vmem:[#allocation8 + $0x28] sm:$0xf]
    %v189 = vld [vmem:[#allocation8 + $0x2c] sm:$0xf]
    %v190 = vld [vmem:[#allocation8 + $0x30] sm:$0xf]
    %v191 = vld [vmem:[#allocation8 + $0x34] sm:$0xf]
    %v192 = vld [vmem:[#allocation8 + $0x38] sm:$0xf]
    %v193 = vld [vmem:[#allocation8 + $0x3c] sm:$0xf]
    %v194 = vld [vmem:[%s4] sm:$0x1]
    %v196 = vlaneseq
    %v197 = vshrl.u32 %v196, 7
    %v198 = vsub.s32 0, %v197
    %v199 = vrot.slane %v194, %v198
    %v217 = vunpack.c.l.b16 %v178
    %v218 = vunpack.c.l.b16 %v179
    %v219 = vunpack.c.l.b16 %v180
    %v220 = vunpack.c.l.b16 %v181
    %v221 = vunpack.c.l.b16 %v182
    %v222 = vunpack.c.l.b16 %v183
    %v223 = vunpack.c.l.b16 %v184
    %v224 = vunpack.c.l.b16 %v185
    %v225 = vunpack.c.l.b16 %v186
    %v226 = vunpack.c.l.b16 %v187
    %v227 = vunpack.c.l.b16 %v188
    %v228 = vunpack.c.l.b16 %v189
    %v229 = vunpack.c.l.b16 %v190
    %v230 = vunpack.c.l.b16 %v191
    %v231 = vunpack.c.l.b16 %v192
    %v232 = vunpack.c.l.b16 %v193
    %v233 = vpack.c.b16 %v218, %v217
    %v234 = vpack.c.b16 %v220, %v219
    %v235 = vpack.c.b16 %v222, %v221
    %v236 = vpack.c.b16 %v224, %v223
    %v237 = vpack.c.b16 %v226, %v225
    %v238 = vpack.c.b16 %v228, %v227
    %v239 = vpack.c.b16 %v230, %v229
    %v240 = vpack.c.b16 %v232, %v231
    %249 = vmatprep.subr.bf16.mxu0 0
    %250 = vmatpush1.bf16.msra.mxu0 %v240
    %251 = vmatprep.subr.bf16.mxu0 0
    %252 = vmatpush1.bf16.msra.mxu0 %v239
    %253 = vmatprep.subr.bf16.mxu0 0
    %254 = vmatpush1.bf16.msra.mxu0 %v238
    %255 = vmatprep.subr.bf16.mxu0 0
    %256 = vmatpush1.bf16.msra.mxu0 %v237
    %257 = vmatprep.subr.bf16.mxu0 0
    %258 = vmatpush1.bf16.msra.mxu0 %v236
    %259 = vmatprep.subr.bf16.mxu0 0
    %260 = vmatpush1.bf16.msra.mxu0 %v235
    %261 = vmatprep.subr.bf16.mxu0 0
    %262 = vmatpush1.bf16.msra.mxu0 %v234
    %263 = vmatprep.subr.bf16.mxu0 0
    %264 = vmatpush1.bf16.msra.mxu0 %v233
    %265 = vmatprep.subr.bf16.mxu0 0
    %266 = vmatpush2.bf16.msra.mxu0 0
    %267 = vmatprep.subr.bf16.mxu0 0
    %268 = vmatpush2.bf16.msra.mxu0 0
    %269 = vmatprep.subr.bf16.mxu0 0
    %270 = vmatpush2.bf16.msra.mxu0 0
    %271 = vmatprep.subr.bf16.mxu0 0
    %272 = vmatpush2.bf16.msra.mxu0 0
    %273 = vmatprep.subr.bf16.mxu0 0
    %274 = vmatpush2.bf16.msra.mxu0 0
    %275 = vmatprep.subr.bf16.mxu0 0
    %276 = vmatpush2.bf16.msra.mxu0 0
    %277 = vmatprep.subr.bf16.mxu0 0
    %278 = vmatpush2.bf16.msra.mxu0 0
    %279 = vmatprep.subr.bf16.mxu0 0
    %280 = vmatpush2.bf16.msra.mxu0 0
    %281 = vmatprep.mubr.bf16.mxu0 0
    %282 = vmatmul.mubr.bf16.gmra.mxu0 %v177
    %v283 = vpop.f32.mrf.mxu0
    %v284 = vadd.f32 %v199, %v283
    %v285 = vpop.f32.mrf.mxu0
    %v286 = vpop.f32.mrf.mxu0
    %v287 = vpop.f32.mrf.mxu0
    %288 = vdwg.mxu0
    %289 = vst [vmem:[#allocation9] sm:$0xff] %v284
    // Predicated region
    $region34: #{tpu_custom_call.1} parent=1 // pred_check
      _
    $region35: #{tpu_custom_call.1} parent=1 // pred_check_branch
      %291 = sbr.rel (0) target = $region37
    $region36: #{tpu_custom_call.1} parent=1 // pred_region
      %s293 = ssub.s32 128, 128
      %294 = vsyncadd [#allocation5], %s293
      %s296 = sshll.u32 [#allocation9], 4
      %s297 = int_to_ptr.vmem [resolvable:$true] %s296
      %299 = dma.vmem_to_hbm [thread:$0]  %s297, 128, %s5, [#allocation5]
    $region37: #{tpu_custom_call.1} parent=1 // pred_fallthru
      _
    // Predicated region
    $region38: #{tpu_custom_call.1} parent=1 // pred_check
      _
    $region39: #{tpu_custom_call.1} parent=1 // pred_check_branch
      %301 = sbr.rel (0) target = $region41
    $region40: #{tpu_custom_call.1} parent=1 // pred_region
      %302 = dma.done [#allocation5], 128
    $region41: #{tpu_custom_call.1} parent=1 // pred_fallthru
      _
    %303 = vsyncpa [#allocation4], 1
    %304 = vsyncpa [#allocation7], 1
    %305 = vsyncpa [#allocation5], 1

</llo_original>
